<compile_context>
chip_gen: v7x
topology: tpu7x:2x2x1
jax: 0.10.0
libtpu: 0.0.40
codegen_flags: <defaults>
</compile_context>

<pallas_src>
import functools

import jax
import jax.numpy as jnp
from jax.experimental import pallas as pl
from jax.experimental.pallas import tpu as pltpu


def _round_up(n: int, m: int) -> int:
    return ((n + m - 1) // m) * m


def dqn_kernel(x_ref, w1_ref, b1_ref, w2_ref, b2_ref, o_ref):
    # fc1: x @ W1 -- cast x to the MXU dtype in-kernel, accumulate in f32.
    x = x_ref[...].astype(w1_ref.dtype)
    h = jnp.dot(x, w1_ref[...], preferred_element_type=jnp.float32)
    # bias + ReLU in f32 on the VPU (v5e has no bf16 VPU path).
    h = jnp.maximum(h + b1_ref[...], 0.0)
    # out: relu(h) @ W2 (cast the h operand only; accumulate in f32).
    y = jnp.dot(h.astype(w2_ref.dtype), w2_ref[...],
                preferred_element_type=jnp.float32)
    o_ref[...] = (y + b2_ref[...]).astype(o_ref.dtype)


def prepare_params(w1, b1, w2, b2, mxu_dtype=jnp.bfloat16):
    """One-time weight bake: bf16 MXU operands, f32 (1, n) biases.

    Call once outside the action-selection / training loop so dqn_forward
    issues no per-call pad/cast dispatches."""
    w1p = jnp.asarray(w1, mxu_dtype)
    w2p = jnp.asarray(w2, mxu_dtype)
    b1p = jnp.asarray(b1, jnp.float32).reshape(1, -1)
    b2p = jnp.asarray(b2, jnp.float32).reshape(1, -1)
    return w1p, b1p, w2p, b2p


@functools.partial(jax.jit, static_argnames=("block_b",))
def dqn_forward(x, w1, b1, w2, b2, *, block_b: int = 4096):
    """x: (B, in_states) f32; w1: (in_states, h1) bf16; b1: (1, h1) f32;
    w2: (h1, out_actions) bf16; b2: (1, out_actions) f32.
    Returns (B, out_actions) in x.dtype."""
    B, in_states = x.shape
    h1 = w1.shape[1]
    out_actions = w2.shape[1]
    out_dtype = x.dtype

    SUB = 8  # f32 sublane quantum: batch-tile granularity

    # Batch tile: big tiles amortize the per-grid-step overhead; the resident
    # weights + double-buffered (tb, in_states)/(tb, out_actions) tiles stay
    # far below even v7x's 32 MiB default scoped VMEM at block_b=4096.
    b_aligned = _round_up(B, SUB)
    tb = min(b_aligned, _round_up(block_b, SUB))
    # v7x has 2 TensorCores and the batch axis is "parallel": give a
    # reasonably sized batch at least 2 grid steps so both cores get work.
    if tb == b_aligned and b_aligned >= 2 * SUB:
        tb = min(tb, _round_up((b_aligned + 1) // 2, SUB))
    b_pad = _round_up(B, tb)

    # Only the batch dim is padded, and only when needed (exact rows sliced
    # back off below). No lane padding of x / output in HBM.
    xp = x if b_pad == B else jnp.zeros((b_pad, in_states), x.dtype).at[:B].set(x)

    grid = (b_pad // tb,)
    itemsize = jnp.dtype(out_dtype).itemsize
    cost = pl.CostEstimate(
        flops=2 * b_pad * (in_states * h1 + h1 * out_actions),
        transcendentals=0,
        bytes_accessed=(xp.size * xp.dtype.itemsize
                        + w1.size * w1.dtype.itemsize
                        + w2.size * w2.dtype.itemsize
                        + b1.size * b1.dtype.itemsize
                        + b2.size * b2.dtype.itemsize
                        + b_pad * out_actions * itemsize),
    )

    out_padded = pl.pallas_call(
        dqn_kernel,
        out_shape=jax.ShapeDtypeStruct((b_pad, out_actions), out_dtype),
        grid_spec=pltpu.PrefetchScalarGridSpec(
            num_scalar_prefetch=0,
            grid=grid,
            in_specs=[
                # x: batch-tiled, full (unpadded) feature dim.
                pl.BlockSpec((tb, in_states), lambda i: (i, 0)),
                # Weights/biases: full-array blocks, resident across the grid.
                pl.BlockSpec((in_states, h1), lambda i: (0, 0)),
                pl.BlockSpec((1, h1), lambda i: (0, 0)),
                pl.BlockSpec((h1, out_actions), lambda i: (0, 0)),
                pl.BlockSpec((1, out_actions), lambda i: (0, 0)),
            ],
            # Lane-narrow output (out_actions is tiny); masked stores are
            # negligible next to the HBM writeback saved.
            out_specs=pl.BlockSpec((tb, out_actions), lambda i: (i, 0)),
        ),
        compiler_params=pltpu.CompilerParams(
            dimension_semantics=("parallel",)),  # v7x: shard batch across 2 TCs
        cost_estimate=cost,
    )(xp, w1, b1, w2, b2)

    return out_padded if b_pad == B else out_padded[:B]


def init_params(key, in_states, h1_nodes, out_actions, dtype=jnp.float32):
    """Mirrors PyTorch nn.Linear default init U[-1/sqrt(fan_in), 1/sqrt(fan_in)]."""
    k1, k2, k3, k4 = jax.random.split(key, 4)
    lim1 = 1.0 / jnp.sqrt(jnp.array(in_states, dtype))
    lim2 = 1.0 / jnp.sqrt(jnp.array(h1_nodes, dtype))
    w1 = jax.random.uniform(k1, (in_states, h1_nodes), dtype, -lim1, lim1)
    b1 = jax.random.uniform(k2, (1, h1_nodes), dtype, -lim1, lim1)
    w2 = jax.random.uniform(k3, (h1_nodes, out_actions), dtype, -lim2, lim2)
    b2 = jax.random.uniform(k4, (1, out_actions), dtype, -lim2, lim2)
    return w1, b1, w2, b2


if __name__ == "__main__":
    # Small shapes consistent with the module (a typical tiny DQN).
    batch, in_states, h1_nodes, out_actions = 8, 16, 32, 4

    key = jax.random.PRNGKey(0)
    kx, kp = jax.random.split(key)
    x = jax.random.normal(kx, (batch, in_states), jnp.float32)
    w1, b1, w2, b2 = init_params(kp, in_states, h1_nodes, out_actions)

    # One-time weight bake (bf16 MXU operands, f32 biases).
    w1p, b1p, w2p, b2p = prepare_params(w1, b1, w2, b2)

    out = dqn_forward(x, w1p, b1p, w2p, b2p)
    out = jax.block_until_ready(out)
    assert out.shape == (batch, out_actions)

    # Reference 1: same bf16-operand / f32-accumulate path in plain JAX (tight check).
    h_ref = jnp.maximum(
        jnp.dot(x.astype(jnp.bfloat16), w1.astype(jnp.bfloat16),
                preferred_element_type=jnp.float32) + b1, 0.0)
    ref_bf16 = jnp.dot(h_ref.astype(jnp.bfloat16), w2.astype(jnp.bfloat16),
                       preferred_element_type=jnp.float32) + b2
    assert jnp.allclose(out, ref_bf16, atol=1e-3, rtol=1e-3)

    # Reference 2: full-f32 forward (loose check; bf16 operands -> small rel err).
    ref_f32 = jnp.maximum(x @ w1 + b1, 0.0) @ w2 + b2
    assert jnp.allclose(out, ref_f32, atol=5e-2, rtol=5e-2)

    print("KERNEL_OK")
</pallas_src>

<mosaic_0001>
module attributes {stable_mosaic.version = 11 : i64} {
  func.func @dqn_kernel(%arg0: i32, %arg1: memref<8x16xf32, #tpu.memory_space<vmem>>, %arg2: memref<16x32xbf16, #tpu.memory_space<vmem>>, %arg3: memref<1x32xf32, #tpu.memory_space<vmem>>, %arg4: memref<32x4xbf16, #tpu.memory_space<vmem>>, %arg5: memref<1x4xf32, #tpu.memory_space<vmem>>, %arg6: memref<8x4xf32, #tpu.memory_space<vmem>>) attributes {dimension_semantics = [#tpu.dimension_semantics<parallel>], iteration_bounds = array<i64: 1>, scalar_prefetch = 0 : i64, scratch_operands = 0 : i64, tpu.core_type = #tpu.core_type<tc>, window_params = [{transform_indices = @transform_0, window_bounds = array<i64: 8, 16>}, {pipeline_mode = #tpu.pipeline_mode<synchronous>, transform_indices = @transform_1, window_bounds = array<i64: 16, 32>}, {pipeline_mode = #tpu.pipeline_mode<synchronous>, transform_indices = @transform_2, window_bounds = array<i64: 1, 32>}, {pipeline_mode = #tpu.pipeline_mode<synchronous>, transform_indices = @transform_3, window_bounds = array<i64: 32, 4>}, {pipeline_mode = #tpu.pipeline_mode<synchronous>, transform_indices = @transform_4, window_bounds = array<i64: 1, 4>}, {transform_indices = @transform_5, window_bounds = array<i64: 8, 4>}]} {
    %c0 = arith.constant 0 : index
    %c0_0 = arith.constant 0 : index
    %0 = vector.load %arg1[%c0, %c0_0] : memref<8x16xf32, #tpu.memory_space<vmem>>, vector<8x16xf32>
    %1 = arith.truncf %0 : vector<8x16xf32> to vector<8x16xbf16>
    %c0_1 = arith.constant 0 : index
    %c0_2 = arith.constant 0 : index
    %2 = vector.load %arg2[%c0_1, %c0_2] : memref<16x32xbf16, #tpu.memory_space<vmem>>, vector<16x32xbf16>
    %cst = arith.constant dense<0.000000e+00> : vector<8x32xf32>
    %3 = tpu.matmul %1, %2, %cst {dimension_numbers = #tpu.dot_dimension_numbers<[1], [0], [0], [1], [0, 0, 1, 1], [], []>} : vector<8x16xbf16>, vector<16x32xbf16>, vector<8x32xf32> -> vector<8x32xf32>
    %c0_3 = arith.constant 0 : index
    %c0_4 = arith.constant 0 : index
    %4 = vector.load %arg3[%c0_3, %c0_4] : memref<1x32xf32, #tpu.memory_space<vmem>>, vector<1x32xf32>
    %5 = vector.broadcast %4 : vector<1x32xf32> to vector<8x32xf32>
    %6 = arith.addf %3, %5 : vector<8x32xf32>
    %cst_5 = arith.constant 0.000000e+00 : f32
    %7 = vector.broadcast %cst_5 : f32 to vector<8x32xf32>
    %8 = arith.maximumf %6, %7 : vector<8x32xf32>
    %9 = arith.truncf %8 : vector<8x32xf32> to vector<8x32xbf16>
    %c0_6 = arith.constant 0 : index
    %c0_7 = arith.constant 0 : index
    %10 = vector.load %arg4[%c0_6, %c0_7] : memref<32x4xbf16, #tpu.memory_space<vmem>>, vector<32x4xbf16>
    %cst_8 = arith.constant dense<0.000000e+00> : vector<8x4xf32>
    %11 = tpu.matmul %9, %10, %cst_8 {dimension_numbers = #tpu.dot_dimension_numbers<[1], [0], [0], [1], [0, 0, 1, 1], [], []>} : vector<8x32xbf16>, vector<32x4xbf16>, vector<8x4xf32> -> vector<8x4xf32>
    %c0_9 = arith.constant 0 : index
    %c0_10 = arith.constant 0 : index
    %12 = vector.load %arg5[%c0_9, %c0_10] : memref<1x4xf32, #tpu.memory_space<vmem>>, vector<1x4xf32>
    %13 = vector.broadcast %12 : vector<1x4xf32> to vector<8x4xf32>
    %14 = arith.addf %11, %13 : vector<8x4xf32>
    %c0_11 = arith.constant 0 : index
    %c0_12 = arith.constant 0 : index
    %15 = vector.load %arg6[%c0_11, %c0_12] : memref<8x4xf32, #tpu.memory_space<vmem>>, vector<8x4xf32>
    tpu.vector_store %arg6[%c0_11, %c0_12], %14 {strides = array<i32>} : memref<8x4xf32, #tpu.memory_space<vmem>>, vector<8x4xf32>,
    return
  }
  func.func @transform_0(%arg0: i32) -> (i32, i32) {
    %c0_i32 = arith.constant 0 : i32
    %c0_i32_0 = arith.constant 0 : i32
    return %arg0, %c0_i32 : i32, i32
  }
  func.func @transform_1(%arg0: i32) -> (i32, i32) {
    %c0_i32 = arith.constant 0 : i32
    %c0_i32_0 = arith.constant 0 : i32
    %c0_i32_1 = arith.constant 0 : i32
    return %c0_i32, %c0_i32_0 : i32, i32
  }
  func.func @transform_2(%arg0: i32) -> (i32, i32) {
    %c0_i32 = arith.constant 0 : i32
    %c0_i32_0 = arith.constant 0 : i32
    %c0_i32_1 = arith.constant 0 : i32
    return %c0_i32, %c0_i32_0 : i32, i32
  }
  func.func @transform_3(%arg0: i32) -> (i32, i32) {
    %c0_i32 = arith.constant 0 : i32
    %c0_i32_0 = arith.constant 0 : i32
    %c0_i32_1 = arith.constant 0 : i32
    return %c0_i32, %c0_i32_0 : i32, i32
  }
  func.func @transform_4(%arg0: i32) -> (i32, i32) {
    %c0_i32 = arith.constant 0 : i32
    %c0_i32_0 = arith.constant 0 : i32
    %c0_i32_1 = arith.constant 0 : i32
    return %c0_i32, %c0_i32_0 : i32, i32
  }
  func.func @transform_5(%arg0: i32) -> (i32, i32) {
    %c0_i32 = arith.constant 0 : i32
    %c0_i32_0 = arith.constant 0 : i32
    return %arg0, %c0_i32 : i32, i32
  }
}

</mosaic_0001>

<llo_original>
// kernel: dqn_forward.1
$region0: #{dqn_forward.1}
  #allocation0 [shape = 'u32[]', space=smem, size = 0x4, offset = 0x4, fixed_abs, tag = 'smem constant byte address 0x4 - core index']
  #allocation1 [shape = 'u32[144,128]{1,0:T(1,128)}', space=vmem, size = 0x12000, scoped, tag = 'internal scratch']
  %s0 = inlined_call_operand.vmem [shape: f32[8,16], index: 0, kind: input, shape index: {}]
  %s1 = inlined_call_operand.vmem [shape: bf16[16,32], index: 1, kind: input, shape index: {}]
  %s2 = inlined_call_operand.vmem [shape: f32[1,32], index: 2, kind: input, shape index: {}]
  %s3 = inlined_call_operand.vmem [shape: bf16[32,4], index: 3, kind: input, shape index: {}]
  %s4 = inlined_call_operand.vmem [shape: f32[1,4], index: 4, kind: input, shape index: {}]
  %s5 = inlined_call_operand.vmem [shape: f32[8,4], index: 5, kind: output, shape index: {}]
  %s6 = sld [smem:[#allocation0]]
  $region30: #{dqn_forward.1} parent=0
    _
  %s8 = ssub.s32 1, %s6
  %s9 = scalar_select 0, %s8, %s6
  // Predicated region
  $region2: #{dqn_forward.1} parent=0 // pred_check
    _
  $region3: #{dqn_forward.1} parent=0 // pred_check_branch
    %11 = sbr.rel (0) target = $region5
  $region4: #{dqn_forward.1} parent=0 // pred_region
    _
  $region5: #{dqn_forward.1} parent=0 // pred_fallthru
    _
  // Predicated region
  $region6: #{dqn_forward.1} parent=0 // pred_check
    _
  $region7: #{dqn_forward.1} parent=0 // pred_check_branch
    %13 = sbr.rel (0) target = $region9
  $region8: #{dqn_forward.1} parent=0 // pred_region
    _
  $region9: #{dqn_forward.1} parent=0 // pred_fallthru
    _
  // Predicated region
  $region10: #{dqn_forward.1} parent=0 // pred_check
    _
  $region11: #{dqn_forward.1} parent=0 // pred_check_branch
    %15 = sbr.rel (0) target = $region13
  $region12: #{dqn_forward.1} parent=0 // pred_region
    _
  $region13: #{dqn_forward.1} parent=0 // pred_fallthru
    _
  // Predicated region
  $region14: #{dqn_forward.1} parent=0 // pred_check
    _
  $region15: #{dqn_forward.1} parent=0 // pred_check_branch
    %17 = sbr.rel (0) target = $region17
  $region16: #{dqn_forward.1} parent=0 // pred_region
    _
  $region17: #{dqn_forward.1} parent=0 // pred_fallthru
    _
  // Predicated region
  $region18: #{dqn_forward.1} parent=0 // pred_check
    _
  $region19: #{dqn_forward.1} parent=0 // pred_check_branch
    %19 = sbr.rel (0) target = $region21
  $region20: #{dqn_forward.1} parent=0 // pred_region
    _
  $region21: #{dqn_forward.1} parent=0 // pred_fallthru
    _
  %v21 = vld [vmem:[%s0] sm:$0xff]
  %v22 = vpack.c.bf16 %v21, %v21
  %v23 = vld [vmem:[%s1] sm:$0xf]
  %v24 = vld [vmem:[%s1 + $0x4] sm:$0xf]
  %v25 = vld [vmem:[%s2] sm:$0x1]
  %v27 = vlaneseq
  %v28 = vshrl.u32 %v27, 7
  %v29 = vsub.s32 0, %v28
  %v30 = vrot.slane %v25, %v29
  %v34 = vunpack.c.l.b16 %v23
  %v35 = vunpack.c.l.b16 %v24
  %v36 = vpack.c.b16 %v35, %v34
  %vm38 = vcmask 130048
  %v40 = vsel %vm38, %v22, 0
  %42 = vmatprep.subr.bf16.mxu0 0
  %43 = vmatpush1.bf16.msra.mxu0 %v36
  %44 = vmatprep.subr.bf16.mxu0 0
  %45 = vmatpush1.bf16.msra.mxu0 0
  %46 = vmatprep.subr.bf16.mxu0 0
  %47 = vmatpush1.bf16.msra.mxu0 0
  %48 = vmatprep.subr.bf16.mxu0 0
  %49 = vmatpush1.bf16.msra.mxu0 0
  %50 = vmatprep.subr.bf16.mxu0 0
  %51 = vmatpush1.bf16.msra.mxu0 0
  %52 = vmatprep.subr.bf16.mxu0 0
  %53 = vmatpush1.bf16.msra.mxu0 0
  %54 = vmatprep.subr.bf16.mxu0 0
  %55 = vmatpush1.bf16.msra.mxu0 0
  %56 = vmatprep.subr.bf16.mxu0 0
  %57 = vmatpush1.bf16.msra.mxu0 0
  %58 = vmatprep.subr.bf16.mxu0 0
  %59 = vmatpush1.bf16.msra.mxu0 0
  %60 = vmatprep.subr.bf16.mxu0 0
  %61 = vmatpush1.bf16.msra.mxu0 0
  %62 = vmatprep.subr.bf16.mxu0 0
  %63 = vmatpush1.bf16.msra.mxu0 0
  %64 = vmatprep.subr.bf16.mxu0 0
  %65 = vmatpush1.bf16.msra.mxu0 0
  %66 = vmatprep.subr.bf16.mxu0 0
  %67 = vmatpush1.bf16.msra.mxu0 0
  %68 = vmatprep.subr.bf16.mxu0 0
  %69 = vmatpush1.bf16.msra.mxu0 0
  %70 = vmatprep.subr.bf16.mxu0 0
  %71 = vmatpush1.bf16.msra.mxu0 0
  %72 = vmatprep.subr.bf16.mxu0 0
  %73 = vmatpush1.bf16.msra.mxu0 0
  %74 = vmatprep.mubr.bf16.mxu0 0
  %75 = vmatmul.mubr.bf16.gmra.mrb[0].mxu0 %v40
  %v76 = vpop.f32.mrb[0].mxu0
  %v77 = vadd.f32 %v30, %v76
  %v78 = vpop.f32.mrb[0].mxu0
  %v79 = vpop.f32.mrb[0].mxu0
  %v80 = vpop.f32.mrb[0].mxu0
  %81 = vdwg.mxu0
  %v82 = vmax.f32 %v77, 0.0
  %v83 = vpack.c.bf16 %v82, %v82
  %v84 = vld [vmem:[%s3] sm:$0xf]
  %v85 = vld [vmem:[%s3 + $0x4] sm:$0xf]
  %v86 = vld [vmem:[%s3 + $0x8] sm:$0xf]
  %v87 = vld [vmem:[%s3 + $0xc] sm:$0xf]
  %v88 = vld [vmem:[%s4] sm:$0x1]
  %v90 = vlaneseq
  %v91 = vshrl.u32 %v90, 7
  %v92 = vsub.s32 0, %v91
  %v93 = vrot.slane %v88, %v92
  %v99 = vunpack.c.l.b16 %v84
  %v100 = vunpack.c.l.b16 %v85
  %v101 = vunpack.c.l.b16 %v86
  %v102 = vunpack.c.l.b16 %v87
  %v103 = vpack.c.b16 %v100, %v99
  %v104 = vpack.c.b16 %v102, %v101
  %vm107 = vcmask 261120
  %v109 = vsel %vm107, %v83, 0
  %111 = vmatprep.subr.bf16.mxu0 0
  %112 = vmatpush1.bf16.msra.mxu0 %v103
  %113 = vmatprep.subr.bf16.mxu0 0
  %114 = vmatpush1.bf16.msra.mxu0 %v104
  %115 = vmatprep.subr.bf16.mxu0 0
  %116 = vmatpush1.bf16.msra.mxu0 0
  %117 = vmatprep.subr.bf16.mxu0 0
  %118 = vmatpush1.bf16.msra.mxu0 0
  %119 = vmatprep.subr.bf16.mxu0 0
  %120 = vmatpush1.bf16.msra.mxu0 0
  %121 = vmatprep.subr.bf16.mxu0 0
  %122 = vmatpush1.bf16.msra.mxu0 0
  %123 = vmatprep.subr.bf16.mxu0 0
  %124 = vmatpush1.bf16.msra.mxu0 0
  %125 = vmatprep.subr.bf16.mxu0 0
  %126 = vmatpush1.bf16.msra.mxu0 0
  %127 = vmatprep.subr.bf16.mxu0 0
  %128 = vmatpush1.bf16.msra.mxu0 0
  %129 = vmatprep.subr.bf16.mxu0 0
  %130 = vmatpush1.bf16.msra.mxu0 0
  %131 = vmatprep.subr.bf16.mxu0 0
  %132 = vmatpush1.bf16.msra.mxu0 0
  %133 = vmatprep.subr.bf16.mxu0 0
  %134 = vmatpush1.bf16.msra.mxu0 0
  %135 = vmatprep.subr.bf16.mxu0 0
  %136 = vmatpush1.bf16.msra.mxu0 0
  %137 = vmatprep.subr.bf16.mxu0 0
  %138 = vmatpush1.bf16.msra.mxu0 0
  %139 = vmatprep.subr.bf16.mxu0 0
  %140 = vmatpush1.bf16.msra.mxu0 0
  %141 = vmatprep.subr.bf16.mxu0 0
  %142 = vmatpush1.bf16.msra.mxu0 0
  %143 = vmatprep.mubr.bf16.mxu0 0
  %144 = vmatmul.mubr.bf16.gmra.mrb[0].mxu0 %v109
  %v145 = vpop.f32.mrb[0].mxu0
  %v146 = vadd.f32 %v93, %v145
  %v147 = vpop.f32.mrb[0].mxu0
  %v148 = vpop.f32.mrb[0].mxu0
  %v149 = vpop.f32.mrb[0].mxu0
  %150 = vdwg.mxu0
  %vm151 = vcmask 31744
  %152 = vst.msk [vmem:[%s5] sm:$0xff] %vm151, %v146
  // Predicated region
  $region22: #{dqn_forward.1} parent=0 // pred_check
    _
  $region23: #{dqn_forward.1} parent=0 // pred_check_branch
    %154 = sbr.rel (0) target = $region25
  $region24: #{dqn_forward.1} parent=0 // pred_region
    _
  $region25: #{dqn_forward.1} parent=0 // pred_fallthru
    _
  // Predicated region
  $region26: #{dqn_forward.1} parent=0 // pred_check
    _
  $region27: #{dqn_forward.1} parent=0 // pred_check_branch
    %156 = sbr.rel (0) target = $region29
  $region28: #{dqn_forward.1} parent=0 // pred_region
    _
  $region29: #{dqn_forward.1} parent=0 // pred_fallthru
    _

</llo_original>
